<compile_context>
chip_gen: v7x
topology: tpu7x:2x2x1
jax: 0.10.0
libtpu: 0.0.40
codegen_flags: <defaults>
</compile_context>

<pallas_src>
import numpy as np
import jax
import jax.numpy as jnp
from jax import lax
from jax.experimental import pallas as pl
from jax.experimental.pallas import tpu as pltpu

# feature_num = (C0, C1): input/output channels C0, hidden channels C1.
N, H, W = 2, 16, 16
C0, C1 = 4, 32
HW = H * W
NHW = N * HW
EPS = 1e-5          # nn.BatchNorm2d default eps


def predictor_c_kernel(x_ref, w1_ref, w2_ref, gb_ref, out_ref):
    # x_ref:   (C0, N*HW)  bf16 — channels on sublanes, all pixels of the batch
    #                            on lanes (512 = 4 * 128, fully lane-dense)
    # w1_ref:  (C1, C0)    bf16 — first 1x1 conv weight  (Cin -> Chidden)
    # w2_ref:  (C0, C1)    bf16 — second 1x1 conv weight (Chidden -> Cin)
    # gb_ref:  (C1, 2)     f32  — packed BatchNorm affine: [:,0]=gamma, [:,1]=beta
    # out_ref: (C0, N*HW)  f32
    x = x_ref[...]

    # ---- conv1x1 #1: one MXU matmul over the whole batch (bf16 in, f32 acc) ----
    y1 = jnp.dot(w1_ref[...], x, preferred_element_type=jnp.float32)   # (C1, 512)

    # ---- BatchNorm2d batch statistics (train mode, biased variance), f32 ----
    cnt = float(NHW)
    mean = jnp.sum(y1, axis=1, keepdims=True) / cnt                    # (C1, 1)
    var = jnp.sum(y1 * y1, axis=1, keepdims=True) / cnt - mean * mean  # one-pass
    gb = gb_ref[...]
    gamma = gb[:, 0:1]
    beta = gb[:, 1:2]
    scale = gamma * lax.rsqrt(var + EPS)                               # (C1, 1)
    shift = beta - mean * scale                                        # (C1, 1)

    # ---- BN affine + ReLU: one 512-lane-dense VPU pass in f32 ----
    h = jnp.maximum(y1 * scale + shift, 0.0)                           # (C1, 512)

    # ---- conv1x1 #2: one MXU matmul, lane-dense f32 store ----
    out_ref[...] = jnp.dot(w2_ref[...], h.astype(jnp.bfloat16),
                           preferred_element_type=jnp.float32)         # (C0, 512)


@jax.jit
def predictor_c(x_nchw, params):
    # NCHW -> CNHW -> (C0, N*HW): ~8 KB transpose+reshape in the wrapper, free.
    # Casting the activations/weights to bf16 also halves the HBM->VMEM DMA.
    x = jnp.transpose(x_nchw, (1, 0, 2, 3)).reshape(C0, NHW).astype(jnp.bfloat16)
    gb = jnp.concatenate([params["gamma"], params["beta"]], axis=1)    # (C1, 2) f32

    out = pl.pallas_call(
        predictor_c_kernel,
        out_shape=jax.ShapeDtypeStruct((C0, NHW), jnp.float32),
        in_specs=[
            pl.BlockSpec(memory_space=pltpu.MemorySpace.VMEM),   # x (bf16)
            pl.BlockSpec(memory_space=pltpu.MemorySpace.VMEM),   # w1 (bf16)
            pl.BlockSpec(memory_space=pltpu.MemorySpace.VMEM),   # w2 (bf16)
            pl.BlockSpec(memory_space=pltpu.MemorySpace.VMEM),   # packed gamma/beta (f32)
        ],
        out_specs=pl.BlockSpec(memory_space=pltpu.MemorySpace.VMEM),
    )(x,
      params["w1"].astype(jnp.bfloat16),
      params["w2"].astype(jnp.bfloat16),
      gb)

    # (C0, N*HW) -> (C0, N, H, W) -> NCHW; free reshapes + tiny transpose.
    return jnp.transpose(out.reshape(C0, N, H, W), (1, 0, 2, 3))


def init_params(key):
    k1, k2, k3, k4 = jax.random.split(key, 4)
    return {
        "w1": 0.3 * jax.random.normal(k1, (C1, C0), jnp.float32),
        "w2": 0.3 * jax.random.normal(k2, (C0, C1), jnp.float32),
        "gamma": 1.0 + 0.1 * jax.random.normal(k3, (C1, 1), jnp.float32),
        "beta": 0.1 * jax.random.normal(k4, (C1, 1), jnp.float32),
    }


def reference(x_nchw, p):
    """Pure-JAX f32 reference with the PyTorch module's semantics."""
    x = x_nchw.astype(jnp.float32)
    y1 = jnp.einsum("oc,nchw->nohw", p["w1"], x,
                    precision=lax.Precision.HIGHEST)
    mean = jnp.mean(y1, axis=(0, 2, 3), keepdims=True)
    var = jnp.mean((y1 - mean) ** 2, axis=(0, 2, 3), keepdims=True)
    bn = (y1 - mean) * lax.rsqrt(var + EPS) * p["gamma"].reshape(1, C1, 1, 1) \
         + p["beta"].reshape(1, C1, 1, 1)
    h = jnp.maximum(bn, 0.0)
    return jnp.einsum("oc,nchw->nohw", p["w2"], h,
                      precision=lax.Precision.HIGHEST)


if __name__ == "__main__":
    key = jax.random.PRNGKey(0)
    kx, kp = jax.random.split(key)
    x = jax.random.normal(kx, (N, C0, H, W), jnp.float32)  # PyTorch NCHW input
    params = init_params(kp)

    out = jax.block_until_ready(predictor_c(x, params))
    ref = jax.block_until_ready(reference(x, params))

    assert out.shape == (N, C0, H, W)
    # Tolerance reflects bf16 MXU operands vs. the f32/HIGHEST reference.
    np.testing.assert_allclose(np.asarray(out), np.asarray(ref),
                               rtol=3e-2, atol=3e-2)
    print("KERNEL_OK")
</pallas_src>

<mosaic_0001>
module attributes {stable_mosaic.version = 11 : i64} {
  func.func @predictor_c_kernel(%arg0: memref<4x512xbf16, #tpu.memory_space<vmem>>, %arg1: memref<32x4xbf16, #tpu.memory_space<vmem>>, %arg2: memref<4x32xbf16, #tpu.memory_space<vmem>>, %arg3: memref<32x2xf32, #tpu.memory_space<vmem>>, %arg4: memref<4x512xf32, #tpu.memory_space<vmem>>) attributes {dimension_semantics = [], scalar_prefetch = 0 : i64, scratch_operands = 0 : i64, tpu.core_type = #tpu.core_type<tc>} {
    %c0 = arith.constant 0 : index
    %c0_0 = arith.constant 0 : index
    %0 = vector.load %arg0[%c0, %c0_0] : memref<4x512xbf16, #tpu.memory_space<vmem>>, vector<4x512xbf16>
    %c0_1 = arith.constant 0 : index
    %c0_2 = arith.constant 0 : index
    %1 = vector.load %arg1[%c0_1, %c0_2] : memref<32x4xbf16, #tpu.memory_space<vmem>>, vector<32x4xbf16>
    %cst = arith.constant dense<0.000000e+00> : vector<32x512xf32>
    %2 = tpu.matmul %1, %0, %cst {dimension_numbers = #tpu.dot_dimension_numbers<[1], [0], [0], [1], [0, 0, 1, 1], [], []>} : vector<32x4xbf16>, vector<4x512xbf16>, vector<32x512xf32> -> vector<32x512xf32>
    %cst_3 = arith.constant dense<0.000000e+00> : vector<32xf32>
    %3 = vector.multi_reduction <add>, %2, %cst_3 [1] : vector<32x512xf32> to vector<32xf32>
    %4 = vector.shape_cast %3 : vector<32xf32> to vector<32x1xf32>
    %cst_4 = arith.constant 5.120000e+02 : f32
    %5 = vector.broadcast %cst_4 : f32 to vector<32x1xf32>
    %6 = arith.divf %4, %5 : vector<32x1xf32>
    %7 = arith.mulf %2, %2 : vector<32x512xf32>
    %cst_5 = arith.constant dense<0.000000e+00> : vector<32xf32>
    %8 = vector.multi_reduction <add>, %7, %cst_5 [1] : vector<32x512xf32> to vector<32xf32>
    %9 = vector.shape_cast %8 : vector<32xf32> to vector<32x1xf32>
    %cst_6 = arith.constant 5.120000e+02 : f32
    %10 = vector.broadcast %cst_6 : f32 to vector<32x1xf32>
    %11 = arith.divf %9, %10 : vector<32x1xf32>
    %12 = arith.mulf %6, %6 : vector<32x1xf32>
    %13 = arith.subf %11, %12 : vector<32x1xf32>
    %c0_7 = arith.constant 0 : index
    %c0_8 = arith.constant 0 : index
    %14 = vector.load %arg3[%c0_7, %c0_8] : memref<32x2xf32, #tpu.memory_space<vmem>>, vector<32x2xf32>
    %15 = vector.extract_strided_slice %14 {offsets = [0, 0], sizes = [32, 1], strides = [1, 1]} : vector<32x2xf32> to vector<32x1xf32>
    %16 = vector.extract_strided_slice %14 {offsets = [0, 1], sizes = [32, 1], strides = [1, 1]} : vector<32x2xf32> to vector<32x1xf32>
    %cst_9 = arith.constant 9.99999974E-6 : f32
    %17 = vector.broadcast %cst_9 : f32 to vector<32x1xf32>
    %18 = arith.addf %13, %17 : vector<32x1xf32>
    %19 = math.rsqrt %18 : vector<32x1xf32>
    %20 = arith.mulf %15, %19 : vector<32x1xf32>
    %21 = arith.mulf %6, %20 : vector<32x1xf32>
    %22 = arith.subf %16, %21 : vector<32x1xf32>
    %23 = vector.broadcast %20 : vector<32x1xf32> to vector<32x512xf32>
    %24 = arith.mulf %2, %23 : vector<32x512xf32>
    %25 = vector.broadcast %22 : vector<32x1xf32> to vector<32x512xf32>
    %26 = arith.addf %24, %25 : vector<32x512xf32>
    %cst_10 = arith.constant 0.000000e+00 : f32
    %27 = vector.broadcast %cst_10 : f32 to vector<32x512xf32>
    %28 = arith.maximumf %26, %27 : vector<32x512xf32>
    %c0_11 = arith.constant 0 : index
    %c0_12 = arith.constant 0 : index
    %29 = vector.load %arg2[%c0_11, %c0_12] : memref<4x32xbf16, #tpu.memory_space<vmem>>, vector<4x32xbf16>
    %30 = arith.truncf %28 : vector<32x512xf32> to vector<32x512xbf16>
    %cst_13 = arith.constant dense<0.000000e+00> : vector<4x512xf32>
    %31 = tpu.matmul %29, %30, %cst_13 {dimension_numbers = #tpu.dot_dimension_numbers<[1], [0], [0], [1], [0, 0, 1, 1], [], []>} : vector<4x32xbf16>, vector<32x512xbf16>, vector<4x512xf32> -> vector<4x512xf32>
    %c0_14 = arith.constant 0 : index
    %c0_15 = arith.constant 0 : index
    %32 = vector.load %arg4[%c0_14, %c0_15] : memref<4x512xf32, #tpu.memory_space<vmem>>, vector<4x512xf32>
    tpu.vector_store %arg4[%c0_14, %c0_15], %31 {strides = array<i32>} : memref<4x512xf32, #tpu.memory_space<vmem>>, vector<4x512xf32>,
    return
  }
}

</mosaic_0001>

<llo_original>
// kernel: predictor_c.1
$region0: #{predictor_c.1}
  #allocation0 [shape = 'u32[]', space=smem, size = 0x4, offset = 0x4, fixed_abs, tag = 'smem constant byte address 0x4 - core index']
  #allocation1 [shape = 'u32[144,128]{1,0:T(1,128)}', space=vmem, size = 0x12000, scoped, tag = 'internal scratch']
  %s0 = inlined_call_operand.vmem [shape: bf16[4,512], index: 0, kind: input, shape index: {}]
  %s1 = inlined_call_operand.vmem [shape: bf16[32,4], index: 1, kind: input, shape index: {}]
  %s2 = inlined_call_operand.vmem [shape: bf16[4,32], index: 2, kind: input, shape index: {}]
  %s3 = inlined_call_operand.vmem [shape: f32[32,2], index: 3, kind: input, shape index: {}]
  %s4 = inlined_call_operand.vmem [shape: f32[4,512], index: 4, kind: output, shape index: {}]
  %s5 = sld [smem:[#allocation0]]
  $region26: #{predictor_c.1} parent=0
    _
  %s7 = ssub.s32 1, %s5
  %s8 = scalar_select 0, %s7, %s5
  // Predicated region
  $region2: #{predictor_c.1} parent=0 // pred_check
    _
  $region3: #{predictor_c.1} parent=0 // pred_check_branch
    %10 = sbr.rel (0) target = $region5
  $region4: #{predictor_c.1} parent=0 // pred_region
    _
  $region5: #{predictor_c.1} parent=0 // pred_fallthru
    _
  // Predicated region
  $region6: #{predictor_c.1} parent=0 // pred_check
    _
  $region7: #{predictor_c.1} parent=0 // pred_check_branch
    %12 = sbr.rel (0) target = $region9
  $region8: #{predictor_c.1} parent=0 // pred_region
    _
  $region9: #{predictor_c.1} parent=0 // pred_fallthru
    _
  // Predicated region
  $region10: #{predictor_c.1} parent=0 // pred_check
    _
  $region11: #{predictor_c.1} parent=0 // pred_check_branch
    %14 = sbr.rel (0) target = $region13
  $region12: #{predictor_c.1} parent=0 // pred_region
    _
  $region13: #{predictor_c.1} parent=0 // pred_fallthru
    _
  // Predicated region
  $region14: #{predictor_c.1} parent=0 // pred_check
    _
  $region15: #{predictor_c.1} parent=0 // pred_check_branch
    %16 = sbr.rel (0) target = $region17
  $region16: #{predictor_c.1} parent=0 // pred_region
    _
  $region17: #{predictor_c.1} parent=0 // pred_fallthru
    _
  %v18 = vld [vmem:[%s0] sm:$0xff]
  %v19 = vld [vmem:[%s1] sm:$0xf]
  %v20 = vld [vmem:[%s1 + $0x4] sm:$0xf]
  %v21 = vld [vmem:[%s1 + $0x8] sm:$0xf]
  %v22 = vld [vmem:[%s1 + $0xc] sm:$0xf]
  %v27 = vunpack.c.l.b16 %v19
  %v28 = vunpack.c.l.b16 %v20
  %v29 = vunpack.c.l.b16 %v21
  %v30 = vunpack.c.l.b16 %v22
  %v31 = vpack.c.b16 %v28, %v27
  %v32 = vpack.c.b16 %v30, %v29
  %v34 = vcombine.high %v18, %v18
  %v36 = vunpack.c.l.s4 1983009808
  %v37 = vunpack.c.0.s8 %v36
  %v38 = vlaneseq
  %v39 = vshrl.u32 %v38, 7
  %v40 = vsub.s32 %v37, %v39
  %v41 = vrot.slane %v18, %v40
  %v43 = vunpack.c.l.s4 1983009808
  %v44 = vunpack.c.0.s8 %v43
  %v45 = vlaneseq
  %v46 = vshrl.u32 %v45, 7
  %v47 = vsub.s32 %v44, %v46
  %v48 = vrot.slane %v34, %v47
  %v49 = vcombine.high %v41, %v41
  %v50 = vcombine.high %v48, %v48
  %vm51 = vcmask 31744
  %v53 = vsel %vm51, %v31, 0
  %v56 = vsel %vm51, %v32, 0
  %vm58 = vcmask 1041408
  %v60 = vsel %vm58, %v41, 0
  %v63 = vsel %vm58, %v49, 0
  %v66 = vsel %vm58, %v48, 0
  %v69 = vsel %vm58, %v50, 0
  %71 = vmatprep.subr.bf16.mxu0 %v63
  %72 = vmatpush1.bf16.msra.mxu0 %v60
  %73 = vmatprep.subr.bf16.mxu0 0
  %74 = vmatpush1.bf16.msra.mxu0 0
  %75 = vmatprep.subr.bf16.mxu0 0
  %76 = vmatpush1.bf16.msra.mxu0 0
  %77 = vmatprep.subr.bf16.mxu0 0
  %78 = vmatpush1.bf16.msra.mxu0 0
  %79 = vmatprep.subr.bf16.mxu0 0
  %80 = vmatpush1.bf16.msra.mxu0 0
  %81 = vmatprep.subr.bf16.mxu0 0
  %82 = vmatpush1.bf16.msra.mxu0 0
  %83 = vmatprep.subr.bf16.mxu0 0
  %84 = vmatpush1.bf16.msra.mxu0 0
  %85 = vmatprep.subr.bf16.mxu0 0
  %86 = vmatpush1.bf16.msra.mxu0 0
  %87 = vmatprep.subr.bf16.mxu0 0
  %88 = vmatpush1.bf16.msra.mxu0 0
  %89 = vmatprep.subr.bf16.mxu0 0
  %90 = vmatpush1.bf16.msra.mxu0 0
  %91 = vmatprep.subr.bf16.mxu0 0
  %92 = vmatpush1.bf16.msra.mxu0 0
  %93 = vmatprep.subr.bf16.mxu0 0
  %94 = vmatpush1.bf16.msra.mxu0 0
  %95 = vmatprep.subr.bf16.mxu0 0
  %96 = vmatpush1.bf16.msra.mxu0 0
  %97 = vmatprep.subr.bf16.mxu0 0
  %98 = vmatpush1.bf16.msra.mxu0 0
  %99 = vmatprep.subr.bf16.mxu0 0
  %100 = vmatpush1.bf16.msra.mxu0 0
  %101 = vmatprep.subr.bf16.mxu0 0
  %102 = vmatpush1.bf16.msra.mxu0 0
  %103 = vmatprep.mubr.bf16.mxu0 0
  %104 = vmatmul.mubr.bf16.gmra.mrb[0].mxu0 %v53
  %v105 = vpop.f32.mrb[0].mxu0
  %v106 = vadd.f32 0.0, %v105
  %v107 = vpop.f32.mrb[0].mxu0
  %v108 = vadd.f32 0.0, %v107
  %v109 = vpop.f32.mrb[0].mxu0
  %v110 = vadd.f32 0.0, %v109
  %v111 = vpop.f32.mrb[0].mxu0
  %v112 = vadd.f32 0.0, %v111
  %113 = vmatprep.mubr.bf16.mxu0 0
  %114 = vmatmul.mubr.bf16.gmra.mrb[0].mxu0 %v56
  %v115 = vpop.f32.mrb[0].mxu0
  %v116 = vadd.f32 0.0, %v115
  %v117 = vpop.f32.mrb[0].mxu0
  %v118 = vadd.f32 0.0, %v117
  %v119 = vpop.f32.mrb[0].mxu0
  %v120 = vadd.f32 0.0, %v119
  %v121 = vpop.f32.mrb[0].mxu0
  %v122 = vadd.f32 0.0, %v121
  %123 = vdwg.mxu0
  %124 = vmatprep.subr.bf16.mxu0 %v69
  %125 = vmatpush1.bf16.msra.mxu0 %v66
  %126 = vmatprep.subr.bf16.mxu0 0
  %127 = vmatpush1.bf16.msra.mxu0 0
  %128 = vmatprep.subr.bf16.mxu0 0
  %129 = vmatpush1.bf16.msra.mxu0 0
  %130 = vmatprep.subr.bf16.mxu0 0
  %131 = vmatpush1.bf16.msra.mxu0 0
  %132 = vmatprep.subr.bf16.mxu0 0
  %133 = vmatpush1.bf16.msra.mxu0 0
  %134 = vmatprep.subr.bf16.mxu0 0
  %135 = vmatpush1.bf16.msra.mxu0 0
  %136 = vmatprep.subr.bf16.mxu0 0
  %137 = vmatpush1.bf16.msra.mxu0 0
  %138 = vmatprep.subr.bf16.mxu0 0
  %139 = vmatpush1.bf16.msra.mxu0 0
  %140 = vmatprep.subr.bf16.mxu0 0
  %141 = vmatpush1.bf16.msra.mxu0 0
  %142 = vmatprep.subr.bf16.mxu0 0
  %143 = vmatpush1.bf16.msra.mxu0 0
  %144 = vmatprep.subr.bf16.mxu0 0
  %145 = vmatpush1.bf16.msra.mxu0 0
  %146 = vmatprep.subr.bf16.mxu0 0
  %147 = vmatpush1.bf16.msra.mxu0 0
  %148 = vmatprep.subr.bf16.mxu0 0
  %149 = vmatpush1.bf16.msra.mxu0 0
  %150 = vmatprep.subr.bf16.mxu0 0
  %151 = vmatpush1.bf16.msra.mxu0 0
  %152 = vmatprep.subr.bf16.mxu0 0
  %153 = vmatpush1.bf16.msra.mxu0 0
  %154 = vmatprep.subr.bf16.mxu0 0
  %155 = vmatpush1.bf16.msra.mxu0 0
  %156 = vmatprep.mubr.bf16.mxu0 0
  %157 = vmatmul.mubr.bf16.gmra.mrb[0].mxu0 %v53
  %v158 = vpop.f32.mrb[0].mxu0
  %v159 = vadd.f32 0.0, %v158
  %v160 = vpop.f32.mrb[0].mxu0
  %v161 = vadd.f32 0.0, %v160
  %v162 = vpop.f32.mrb[0].mxu0
  %v163 = vadd.f32 0.0, %v162
  %v164 = vpop.f32.mrb[0].mxu0
  %v165 = vadd.f32 0.0, %v164
  %166 = vmatprep.mubr.bf16.mxu0 0
  %167 = vmatmul.mubr.bf16.gmra.mrb[0].mxu0 %v56
  %v168 = vpop.f32.mrb[0].mxu0
  %v169 = vadd.f32 0.0, %v168
  %v170 = vpop.f32.mrb[0].mxu0
  %v171 = vadd.f32 0.0, %v170
  %v172 = vpop.f32.mrb[0].mxu0
  %v173 = vadd.f32 0.0, %v172
  %v174 = vpop.f32.mrb[0].mxu0
  %v175 = vadd.f32 0.0, %v174
  %176 = vdwg.mxu0
  %v177 = vadd.f32 %v106, %v108
  %v178 = vadd.f32 %v177, %v159
  %v179 = vadd.f32 %v178, %v161
  %180 = vadd.xlane.f32.xlu0 %v179
  %v181 = vpop.xlane.xlu0 %180
  %v182 = vadd.f32 %v110, %v112
  %v183 = vadd.f32 %v182, %v163
  %v184 = vadd.f32 %v183, %v165
  %185 = vadd.xlane.f32.xlu0 %v184
  %v186 = vpop.xlane.xlu0 %185
  %v187 = vadd.f32 %v116, %v118
  %v188 = vadd.f32 %v187, %v169
  %v189 = vadd.f32 %v188, %v171
  %190 = vadd.xlane.f32.xlu0 %v189
  %v191 = vpop.xlane.xlu0 %190
  %v192 = vadd.f32 %v120, %v122
  %v193 = vadd.f32 %v192, %v173
  %v194 = vadd.f32 %v193, %v175
  %195 = vadd.xlane.f32.xlu0 %v194
  %v196 = vpop.xlane.xlu0 %195
  %v197 = vrcp.pop 512.0
  %v198 = vmul.f32 %v181, %v197
  %v199 = vmul.f32 %v186, %v197
  %v200 = vmul.f32 %v191, %v197
  %v201 = vmul.f32 %v196, %v197
  %v202 = vmul.f32 %v106, %v106
  %v203 = vmul.f32 %v108, %v108
  %v204 = vmul.f32 %v159, %v159
  %v205 = vmul.f32 %v161, %v161
  %v206 = vmul.f32 %v110, %v110
  %v207 = vmul.f32 %v112, %v112
  %v208 = vmul.f32 %v163, %v163
  %v209 = vmul.f32 %v165, %v165
  %v210 = vmul.f32 %v116, %v116
  %v211 = vmul.f32 %v118, %v118
  %v212 = vmul.f32 %v169, %v169
  %v213 = vmul.f32 %v171, %v171
  %v214 = vmul.f32 %v120, %v120
  %v215 = vmul.f32 %v122, %v122
  %v216 = vmul.f32 %v173, %v173
  %v217 = vmul.f32 %v175, %v175
  %v218 = vadd.f32 %v202, %v203
  %v219 = vadd.f32 %v218, %v204
  %v220 = vadd.f32 %v219, %v205
  %221 = vadd.xlane.f32.xlu0 %v220
  %v222 = vpop.xlane.xlu0 %221
  %v223 = vadd.f32 %v206, %v207
  %v224 = vadd.f32 %v223, %v208
  %v225 = vadd.f32 %v224, %v209
  %226 = vadd.xlane.f32.xlu0 %v225
  %v227 = vpop.xlane.xlu0 %226
  %v228 = vadd.f32 %v210, %v211
  %v229 = vadd.f32 %v228, %v212
  %v230 = vadd.f32 %v229, %v213
  %231 = vadd.xlane.f32.xlu0 %v230
  %v232 = vpop.xlane.xlu0 %231
  %v233 = vadd.f32 %v214, %v215
  %v234 = vadd.f32 %v233, %v216
  %v235 = vadd.f32 %v234, %v217
  %236 = vadd.xlane.f32.xlu0 %v235
  %v237 = vpop.xlane.xlu0 %236
  %v238 = vmul.f32 %v222, %v197
  %v239 = vmul.f32 %v227, %v197
  %v240 = vmul.f32 %v232, %v197
  %v241 = vmul.f32 %v237, %v197
  %v242 = vmul.f32 %v198, %v198
  %v243 = vmul.f32 %v199, %v199
  %v244 = vmul.f32 %v200, %v200
  %v245 = vmul.f32 %v201, %v201
  %v246 = vsub.f32 %v238, %v242
  %v247 = vsub.f32 %v239, %v243
  %v248 = vsub.f32 %v240, %v244
  %v249 = vsub.f32 %v241, %v245
  %v250 = vld [vmem:[%s3] sm:$0xff]
  %v251 = vld [vmem:[%s3 + $0x8] sm:$0xff]
  %v252 = vld [vmem:[%s3 + $0x10] sm:$0xff]
  %v253 = vld [vmem:[%s3 + $0x18] sm:$0xff]
  %v254 = vadd.f32 %v246, 1e-05
  %v255 = vadd.f32 %v247, 1e-05
  %v256 = vadd.f32 %v248, 1e-05
  %v257 = vadd.f32 %v249, 1e-05
  %v258 = vrsqrt.pop %v254
  %v259 = vrsqrt.pop %v255
  %v260 = vrsqrt.pop %v256
  %v261 = vrsqrt.pop %v257
  %v262 = vmul.f32 %v250, %v258
  %v263 = vmul.f32 %v251, %v259
  %v264 = vmul.f32 %v252, %v260
  %v265 = vmul.f32 %v253, %v261
  %v266 = vmul.f32 %v198, %v262
  %v267 = vmul.f32 %v199, %v263
  %v268 = vmul.f32 %v200, %v264
  %v269 = vmul.f32 %v201, %v265
  %274 = vrot.lane.b32.xlu0 %v266, 1
  %v275 = vpop.permute.xlu0 %274
  %276 = vrot.lane.b32.xlu0 %v267, 1
  %v277 = vpop.permute.xlu0 %276
  %278 = vrot.lane.b32.xlu0 %v268, 1
  %v279 = vpop.permute.xlu0 %278
  %280 = vrot.lane.b32.xlu0 %v269, 1
  %v281 = vpop.permute.xlu0 %280
  %v286 = vsub.f32 %v250, %v275
  %v287 = vsub.f32 %v251, %v277
  %v288 = vsub.f32 %v252, %v279
  %v289 = vsub.f32 %v253, %v281
  %291 = vset.pattern.permute.xlu0 0
  %292 = vperm.xlu0 %291, %v262
  %v293 = vpop.permute.xlu0 %292
  %296 = vset.pattern.permute.xlu0 0
  %297 = vperm.xlu0 %296, %v263
  %v298 = vpop.permute.xlu0 %297
  %301 = vset.pattern.permute.xlu0 0
  %302 = vperm.xlu0 %301, %v264
  %v303 = vpop.permute.xlu0 %302
  %306 = vset.pattern.permute.xlu0 0
  %307 = vperm.xlu0 %306, %v265
  %v308 = vpop.permute.xlu0 %307
  %v310 = vmul.f32 %v106, %v293
  %v311 = vmul.f32 %v108, %v293
  %v312 = vmul.f32 %v159, %v293
  %v313 = vmul.f32 %v161, %v293
  %v314 = vmul.f32 %v110, %v298
  %v315 = vmul.f32 %v112, %v298
  %v316 = vmul.f32 %v163, %v298
  %v317 = vmul.f32 %v165, %v298
  %v318 = vmul.f32 %v116, %v303
  %v319 = vmul.f32 %v118, %v303
  %v320 = vmul.f32 %v169, %v303
  %v321 = vmul.f32 %v171, %v303
  %v322 = vmul.f32 %v120, %v308
  %v323 = vmul.f32 %v122, %v308
  %v324 = vmul.f32 %v173, %v308
  %v325 = vmul.f32 %v175, %v308
  %327 = vset.pattern.permute.xlu0 1
  %328 = vperm.xlu0 %327, %v286
  %v329 = vpop.permute.xlu0 %328
  %332 = vset.pattern.permute.xlu0 1
  %333 = vperm.xlu0 %332, %v287
  %v334 = vpop.permute.xlu0 %333
  %337 = vset.pattern.permute.xlu0 1
  %338 = vperm.xlu0 %337, %v288
  %v339 = vpop.permute.xlu0 %338
  %342 = vset.pattern.permute.xlu0 1
  %343 = vperm.xlu0 %342, %v289
  %v344 = vpop.permute.xlu0 %343
  %v346 = vadd.f32 %v310, %v329
  %v347 = vadd.f32 %v311, %v329
  %v348 = vadd.f32 %v312, %v329
  %v349 = vadd.f32 %v313, %v329
  %v350 = vadd.f32 %v314, %v334
  %v351 = vadd.f32 %v315, %v334
  %v352 = vadd.f32 %v316, %v334
  %v353 = vadd.f32 %v317, %v334
  %v354 = vadd.f32 %v318, %v339
  %v355 = vadd.f32 %v319, %v339
  %v356 = vadd.f32 %v320, %v339
  %v357 = vadd.f32 %v321, %v339
  %v358 = vadd.f32 %v322, %v344
  %v359 = vadd.f32 %v323, %v344
  %v360 = vadd.f32 %v324, %v344
  %v361 = vadd.f32 %v325, %v344
  %v362 = vmax.f32 %v346, 0.0
  %v363 = vmax.f32 %v347, 0.0
  %v364 = vmax.f32 %v348, 0.0
  %v365 = vmax.f32 %v349, 0.0
  %v366 = vmax.f32 %v350, 0.0
  %v367 = vmax.f32 %v351, 0.0
  %v368 = vmax.f32 %v352, 0.0
  %v369 = vmax.f32 %v353, 0.0
  %v370 = vmax.f32 %v354, 0.0
  %v371 = vmax.f32 %v355, 0.0
  %v372 = vmax.f32 %v356, 0.0
  %v373 = vmax.f32 %v357, 0.0
  %v374 = vmax.f32 %v358, 0.0
  %v375 = vmax.f32 %v359, 0.0
  %v376 = vmax.f32 %v360, 0.0
  %v377 = vmax.f32 %v361, 0.0
  %v378 = vld [vmem:[%s2] sm:$0x3]
  %v379 = vpack.c.bf16 %v366, %v362
  %v380 = vpack.c.bf16 %v367, %v363
  %v381 = vpack.c.bf16 %v368, %v364
  %v382 = vpack.c.bf16 %v369, %v365
  %v383 = vpack.c.bf16 %v374, %v370
  %v384 = vpack.c.bf16 %v375, %v371
  %v385 = vpack.c.bf16 %v376, %v372
  %v386 = vpack.c.bf16 %v377, %v373
  %vm387 = vcmask 261120
  %v389 = vsel %vm387, %v378, 0
  %391 = vmatprep.subr.bf16.mxu0 %v380
  %392 = vmatpush1.bf16.msra.mxu0 %v379
  %393 = vmatprep.subr.bf16.mxu0 %v384
  %394 = vmatpush1.bf16.msra.mxu0 %v383
  %395 = vmatprep.subr.bf16.mxu0 0
  %396 = vmatpush1.bf16.msra.mxu0 0
  %397 = vmatprep.subr.bf16.mxu0 0
  %398 = vmatpush1.bf16.msra.mxu0 0
  %399 = vmatprep.subr.bf16.mxu0 0
  %400 = vmatpush1.bf16.msra.mxu0 0
  %401 = vmatprep.subr.bf16.mxu0 0
  %402 = vmatpush1.bf16.msra.mxu0 0
  %403 = vmatprep.subr.bf16.mxu0 0
  %404 = vmatpush1.bf16.msra.mxu0 0
  %405 = vmatprep.subr.bf16.mxu0 0
  %406 = vmatpush1.bf16.msra.mxu0 0
  %407 = vmatprep.subr.bf16.mxu0 0
  %408 = vmatpush1.bf16.msra.mxu0 0
  %409 = vmatprep.subr.bf16.mxu0 0
  %410 = vmatpush1.bf16.msra.mxu0 0
  %411 = vmatprep.subr.bf16.mxu0 0
  %412 = vmatpush1.bf16.msra.mxu0 0
  %413 = vmatprep.subr.bf16.mxu0 0
  %414 = vmatpush1.bf16.msra.mxu0 0
  %415 = vmatprep.subr.bf16.mxu0 0
  %416 = vmatpush1.bf16.msra.mxu0 0
  %417 = vmatprep.subr.bf16.mxu0 0
  %418 = vmatpush1.bf16.msra.mxu0 0
  %419 = vmatprep.subr.bf16.mxu0 0
  %420 = vmatpush1.bf16.msra.mxu0 0
  %421 = vmatprep.subr.bf16.mxu0 0
  %422 = vmatpush1.bf16.msra.mxu0 0
  %423 = vmatprep.mubr.bf16.mxu0 0
  %424 = vmatmul.mubr.bf16.gmra.mrb[0].mxu0 %v389
  %v425 = vpop.f32.mrb[0].mxu0
  %v426 = vadd.f32 0.0, %v425
  %v427 = vpop.f32.mrb[0].mxu0
  %v428 = vadd.f32 0.0, %v427
  %v429 = vpop.f32.mrb[0].mxu0
  %v430 = vpop.f32.mrb[0].mxu0
  %431 = vdwg.mxu0
  %432 = vmatprep.subr.bf16.mxu0 %v382
  %433 = vmatpush1.bf16.msra.mxu0 %v381
  %434 = vmatprep.subr.bf16.mxu0 %v386
  %435 = vmatpush1.bf16.msra.mxu0 %v385
  %436 = vmatprep.subr.bf16.mxu0 0
  %437 = vmatpush1.bf16.msra.mxu0 0
  %438 = vmatprep.subr.bf16.mxu0 0
  %439 = vmatpush1.bf16.msra.mxu0 0
  %440 = vmatprep.subr.bf16.mxu0 0
  %441 = vmatpush1.bf16.msra.mxu0 0
  %442 = vmatprep.subr.bf16.mxu0 0
  %443 = vmatpush1.bf16.msra.mxu0 0
  %444 = vmatprep.subr.bf16.mxu0 0
  %445 = vmatpush1.bf16.msra.mxu0 0
  %446 = vmatprep.subr.bf16.mxu0 0
  %447 = vmatpush1.bf16.msra.mxu0 0
  %448 = vmatprep.subr.bf16.mxu0 0
  %449 = vmatpush1.bf16.msra.mxu0 0
  %450 = vmatprep.subr.bf16.mxu0 0
  %451 = vmatpush1.bf16.msra.mxu0 0
  %452 = vmatprep.subr.bf16.mxu0 0
  %453 = vmatpush1.bf16.msra.mxu0 0
  %454 = vmatprep.subr.bf16.mxu0 0
  %455 = vmatpush1.bf16.msra.mxu0 0
  %456 = vmatprep.subr.bf16.mxu0 0
  %457 = vmatpush1.bf16.msra.mxu0 0
  %458 = vmatprep.subr.bf16.mxu0 0
  %459 = vmatpush1.bf16.msra.mxu0 0
  %460 = vmatprep.subr.bf16.mxu0 0
  %461 = vmatpush1.bf16.msra.mxu0 0
  %462 = vmatprep.subr.bf16.mxu0 0
  %463 = vmatpush1.bf16.msra.mxu0 0
  %464 = vmatprep.mubr.bf16.mxu0 0
  %465 = vmatmul.mubr.bf16.gmra.mrb[0].mxu0 %v389
  %v466 = vpop.f32.mrb[0].mxu0
  %v467 = vadd.f32 0.0, %v466
  %v468 = vpop.f32.mrb[0].mxu0
  %v469 = vadd.f32 0.0, %v468
  %v470 = vpop.f32.mrb[0].mxu0
  %v471 = vpop.f32.mrb[0].mxu0
  %472 = vdwg.mxu0
  %v477 = vcombine.low %v426, %v428
  %v478 = vcombine.low %v467, %v469
  %481 = vst [vmem:[%s4] sm:$0xff] %v477
  %482 = vst [vmem:[%s4 + $0x8] sm:$0xff] %v478
  // Predicated region
  $region18: #{predictor_c.1} parent=0 // pred_check
    _
  $region19: #{predictor_c.1} parent=0 // pred_check_branch
    %484 = sbr.rel (0) target = $region21
  $region20: #{predictor_c.1} parent=0 // pred_region
    _
  $region21: #{predictor_c.1} parent=0 // pred_fallthru
    _
  // Predicated region
  $region22: #{predictor_c.1} parent=0 // pred_check
    _
  $region23: #{predictor_c.1} parent=0 // pred_check_branch
    %486 = sbr.rel (0) target = $region25
  $region24: #{predictor_c.1} parent=0 // pred_region
    _
  $region25: #{predictor_c.1} parent=0 // pred_fallthru
    _

</llo_original>
